<compile_context>
chip_gen: v7x
topology: tpu7x:2x2x1
jax: 0.10.0
libtpu: 0.0.40
codegen_flags: <defaults>
</compile_context>

<pallas_src>
import functools

import jax
import jax.numpy as jnp
import numpy as np
from jax.experimental import pallas as pl
from jax.experimental.pallas import tpu as pltpu


# ----------------------------- Pallas kernels -----------------------------


def _matmul_kernel_out(x_ref, w_ref, o_ref, *, precision):
    # f32 output: accumulate directly into the VMEM-resident output block
    # (same output block index across the K axis -> no scratch, no finalize).
    @pl.when(pl.program_id(2) == 0)
    def _():
        o_ref[...] = jnp.zeros_like(o_ref)

    o_ref[...] += jnp.dot(
        x_ref[...], w_ref[...],
        preferred_element_type=jnp.float32, precision=precision,
    )


def _matmul_kernel_acc(x_ref, w_ref, o_ref, acc_ref, *, precision):
    # Non-f32 output: f32 VMEM accumulator, cast on the last K step.
    @pl.when(pl.program_id(2) == 0)
    def _():
        acc_ref[...] = jnp.zeros_like(acc_ref)

    acc_ref[...] += jnp.dot(
        x_ref[...], w_ref[...],
        preferred_element_type=jnp.float32, precision=precision,
    )

    @pl.when(pl.program_id(2) == pl.num_programs(2) - 1)
    def _():
        o_ref[...] = acc_ref[...].astype(o_ref.dtype)


# ------------------------------ config helpers ------------------------------


def _cdiv(a, b):
    return -(-a // b)


def _round_up(v, m):
    return _cdiv(v, m) * m


def _tpu_generation_and_vmem():
    """Best-effort (TPU major generation, physical VMEM bytes per core)."""
    gen, vmem_phys = 0, None
    try:
        info = pltpu.get_tpu_info()
        vmem_phys = getattr(info, "vmem_capacity_bytes", None)
        cv = getattr(info, "chip_version", None)
        if cv is not None:
            digits = [c for c in str(getattr(cv, "name", cv)) if c.isdigit()]
            if digits:
                gen = int(digits[0])
    except Exception:
        pass
    if gen == 0:
        try:
            kind = jax.devices()[0].device_kind  # e.g. "TPU v6e", "TPU7x"
            digits = [c for c in kind if c.isdigit()]
            if digits:
                gen = int(digits[0])
        except Exception:
            pass
    return gen, vmem_phys


def _default_config():
    """(n/k tile granule, vmem_limit_bytes) per TPU generation."""
    gen, vmem_phys = _tpu_generation_and_vmem()
    if gen >= 7:          # v7x: 2x256x256 MXU, only 64 MiB VMEM per TC
        nk_gran, vmem_limit = 256, 48 * 1024 * 1024
    elif gen == 6:        # v6e: 2x256x256 MXU, 128 MiB VMEM
        nk_gran, vmem_limit = 256, 64 * 1024 * 1024
    elif gen == 5:        # v5e/v5p: 4x128x128 MXU, 128 MiB VMEM
        nk_gran, vmem_limit = 128, 64 * 1024 * 1024
    else:                 # unknown / older: be conservative
        nk_gran, vmem_limit = 128, 32 * 1024 * 1024
    if vmem_phys:
        vmem_limit = min(vmem_limit, int(0.75 * vmem_phys))
    return nk_gran, vmem_limit


def _pick_tile(dim, preferred, granule):
    """Near-`preferred` granule-multiple tile; the caller pads `dim` up to a
    multiple of it (one partially-zero tail tile instead of collapsing every
    tile for awkward dims)."""
    preferred = max(granule, (preferred // granule) * granule)
    padded = _round_up(dim, granule)
    if padded <= preferred:
        return padded
    ntiles = _cdiv(padded, preferred)
    return _round_up(_cdiv(padded, ntiles), granule)


def _compiler_params(vmem_limit_bytes, n_inputs):
    kwargs = dict(
        dimension_semantics=("parallel", "parallel", "arbitrary"),
        vmem_limit_bytes=int(vmem_limit_bytes),
    )
    try:
        # Lets XLA fuse the wrapper-side cast/pad producers into the input DMA.
        return pltpu.CompilerParams(**kwargs, allow_input_fusion=[True] * n_inputs)
    except TypeError:
        return pltpu.CompilerParams(**kwargs)


# ----------------------------- Pallas GEMM call -----------------------------


def matmul_pallas(
    x,
    w,
    *,
    out_dtype=jnp.float32,
    tm=None,
    tn=None,
    tk=None,
    precision=None,
    vmem_limit_bytes=None,
):
    """Tiled, pipelined MXU matmul: (M, K) @ (K, N) -> (M, N)."""
    M, K = x.shape
    K2, N = w.shape
    assert K == K2, (x.shape, w.shape)

    nk_gran, default_vmem = _default_config()
    if vmem_limit_bytes is None:
        vmem_limit_bytes = default_vmem

    x_isz = jnp.dtype(x.dtype).itemsize
    w_isz = jnp.dtype(w.dtype).itemsize
    out_isz = jnp.dtype(out_dtype).itemsize

    # Sublane granule: 16 rows for bf16 (packed), 8 for f32. Lane granule: 128,
    # widened to 256 on v6e/v7x for large dims (fills the 256-wide MXU).
    m_gran = 16 if x_isz == 2 else 8
    n_gran = nk_gran if N >= nk_gran else 128
    k_gran = nk_gran if K >= nk_gran else 128

    tm = _pick_tile(M, tm or 512, m_gran)
    tn = _pick_tile(N, tn or 512, n_gran)
    tk = _pick_tile(K, tk or 1024, k_gran)

    # Megacore (v7x): if M fits in one tile, split N so the "parallel" grid
    # axes have >= 2 blocks and both TensorCores get work.
    if _round_up(M, tm) // tm == 1:
        np_g = _round_up(N, n_gran)
        if _round_up(N, tn) // tn < 2 and np_g >= 2 * n_gran:
            tn = max(n_gran, (np_g // 2 // n_gran) * n_gran)

    use_acc = out_dtype != jnp.float32
    have_buffered = hasattr(pl, "Buffered")

    def footprint(tm_, tn_, tk_, w_bufs):
        b = 2 * tm_ * tk_ * x_isz            # double-buffered activations
        b += w_bufs * tk_ * tn_ * w_isz      # (possibly 3-deep) weight stream
        b += 2 * tm_ * tn_ * out_isz         # output block
        if use_acc:
            b += tm_ * tn_ * 4               # f32 accumulator scratch
        return b

    # Fit the working set inside the per-generation VMEM budget.
    while True:
        Mp, Np, Kp = _round_up(M, tm), _round_up(N, tn), _round_up(K, tk)
        grid = (Mp // tm, Np // tn, Kp // tk)
        w_bufs = 3 if (have_buffered and grid[0] == 1 and grid[1] * grid[2] > 2) else 2
        if footprint(tm, tn, tk, w_bufs) <= int(0.8 * vmem_limit_bytes):
            break
        cands = [(tk, k_gran, "k"), (tn, n_gran, "n"), (tm, m_gran, "m")]
        cands = [c for c in cands if c[0] > c[1]]
        if not cands:
            break
        which = max(cands)[2]
        if which == "k":
            tk = _round_up(max(k_gran, tk // 2), k_gran)
        elif which == "n":
            tn = _round_up(max(n_gran, tn // 2), n_gran)
        else:
            tm = _round_up(max(m_gran, tm // 2), m_gran)

    # Zero-pad so every block is full and lane-dense (padding contributes 0).
    if (Mp, Kp) != (M, K):
        x = jnp.pad(x, ((0, Mp - M), (0, Kp - K)))
    if (Kp, Np) != (K, N):
        w = jnp.pad(w, ((0, Kp - K), (0, Np - N)))

    x_spec = pl.BlockSpec((tm, tk), lambda i, j, k: (i, k))
    w_spec = pl.BlockSpec((tk, tn), lambda i, j, k: (k, j))
    if w_bufs > 2:
        try:
            # Deeper pipelining on the weight stream (no reuse across i).
            w_spec = pl.BlockSpec((tk, tn), lambda i, j, k: (k, j),
                                  pipeline_mode=pl.Buffered(w_bufs))
        except TypeError:
            w_spec = pl.BlockSpec((tk, tn), lambda i, j, k: (k, j))

    if use_acc:
        kernel = functools.partial(_matmul_kernel_acc, precision=precision)
        scratch = [pltpu.VMEM((tm, tn), jnp.float32)]
    else:
        kernel = functools.partial(_matmul_kernel_out, precision=precision)
        scratch = []

    out = pl.pallas_call(
        kernel,
        out_shape=jax.ShapeDtypeStruct((Mp, Np), out_dtype),
        grid_spec=pltpu.PrefetchScalarGridSpec(
            num_scalar_prefetch=0,
            grid=grid,
            in_specs=[x_spec, w_spec],
            out_specs=pl.BlockSpec((tm, tn), lambda i, j, k: (i, j)),
            scratch_shapes=scratch,
        ),
        compiler_params=_compiler_params(vmem_limit_bytes, n_inputs=2),
    )(x, w)

    if (Mp, Np) != (M, N):
        out = out[:M, :N]
    return out


# --------------------------- module-level wrapper ---------------------------


def dense_general_optimized(
    inputs,
    weight,
    out_features,
    *,
    compute_dtype=jnp.bfloat16,
    out_dtype=jnp.float32,
):
    """DenseGeneralOptimized.forward.

    inputs : (..., in_flat) ; weight : (in_flat, prod(out_features)).

    NOTE: by default originally-f32 inputs/weights are cast to bf16 at the
    kernel boundary (MXU peak, half the HBM bytes) while accumulating in f32 —
    a deliberate accuracy/perf tradeoff vs. the torch f32 matmul.  Pass
    compute_dtype=None for the f32 path (kernel dot uses Precision.HIGHEST).
    Under jit, the cast/pad fuses into the pallas_call input DMA
    (allow_input_fusion); for static weights, pre-cast them once outside the
    hot path for best results.
    """
    batch_dims = inputs.shape[:-1]
    in_flat = weight.shape[0]
    x_flat = inputs.reshape(-1, in_flat)
    if compute_dtype is not None:
        x_flat = x_flat.astype(compute_dtype)
        weight = weight.astype(compute_dtype)
    precision = (
        jax.lax.Precision.HIGHEST if x_flat.dtype == jnp.float32 else None
    )
    out_flat = matmul_pallas(
        x_flat, weight, out_dtype=out_dtype, precision=precision
    )
    return out_flat.reshape(*batch_dims, *out_features)


# --------------------------------- main ---------------------------------

if __name__ == "__main__":
    key = jax.random.PRNGKey(0)
    k1, k2, k3, k4 = jax.random.split(key, 4)

    # --- DenseGeneralOptimized demo: small, non-128-aligned in/out features
    #     (exercises padding + tail slicing), bf16 compute, jitted so the
    #     cast/pad can fuse into the kernel's input DMA. ---
    B, T = 2, 8
    in_features = (96,)
    out_features = (4, 30)
    in_flat = int(np.prod(in_features))
    out_flat = int(np.prod(out_features))

    x = jax.random.normal(k1, (B, T, in_flat), dtype=jnp.float32)
    w = 0.05 * jax.random.normal(k2, (in_flat, out_flat), dtype=jnp.float32)

    dense_bf16 = jax.jit(
        functools.partial(
            dense_general_optimized,
            out_features=out_features,
            compute_dtype=jnp.bfloat16,
        )
    )
    out = jax.block_until_ready(dense_bf16(x, w))
    assert out.shape == (B, T) + out_features

    x_bf = x.reshape(-1, in_flat).astype(jnp.bfloat16)
    w_bf = w.astype(jnp.bfloat16)
    ref = jnp.dot(x_bf, w_bf, preferred_element_type=jnp.float32).reshape(
        B, T, *out_features
    )
    np.testing.assert_allclose(np.asarray(out), np.asarray(ref), rtol=2e-3, atol=2e-3)

    # --- Larger GEMM exercising the full (M, N, K) grid: multi-step K
    #     accumulation (f32 output accumulated in-place), N split across two
    #     blocks (megacore), 3-deep weight buffering. ---
    M, K, N = 384, 2048, 512
    a = jax.random.normal(k3, (M, K), dtype=jnp.float32).astype(jnp.bfloat16)
    b = (0.05 * jax.random.normal(k4, (K, N), dtype=jnp.float32)).astype(jnp.bfloat16)
    c = jax.block_until_ready(matmul_pallas(a, b, out_dtype=jnp.float32))
    c_ref = jnp.dot(a, b, preferred_element_type=jnp.float32)
    np.testing.assert_allclose(np.asarray(c), np.asarray(c_ref), rtol=2e-3, atol=2e-3)

    # --- bf16 output path (uses the f32 scratch-accumulator kernel variant;
    #     halves output HBM writeback, best on v5e's single store slot). ---
    c_bf = jax.block_until_ready(matmul_pallas(a, b, out_dtype=jnp.bfloat16))
    np.testing.assert_allclose(
        np.asarray(c_bf, dtype=np.float32),
        np.asarray(c_ref.astype(jnp.bfloat16), dtype=np.float32),
        rtol=2e-2,
        atol=2e-2,
    )

    # --- Pure-f32 path (no bf16 cast), matching the original torch dtype flow;
    #     kernel dot runs at Precision.HIGHEST. ---
    dense_f32 = jax.jit(
        functools.partial(
            dense_general_optimized, out_features=out_features, compute_dtype=None
        )
    )
    out_f32 = jax.block_until_ready(dense_f32(x, w))
    ref_f32 = jnp.dot(
        x.reshape(-1, in_flat),
        w,
        preferred_element_type=jnp.float32,
        precision=jax.lax.Precision.HIGHEST,
    ).reshape(B, T, *out_features)
    np.testing.assert_allclose(
        np.asarray(out_f32), np.asarray(ref_f32), rtol=2e-3, atol=2e-3
    )

    print("KERNEL_OK")
</pallas_src>

<mosaic_0001>
module attributes {stable_mosaic.version = 11 : i64} {
  func.func @_matmul_kernel_out(%arg0: i32, %arg1: i32, %arg2: i32, %arg3: memref<16x128xbf16, #tpu.memory_space<vmem>>, %arg4: memref<128x128xbf16, #tpu.memory_space<vmem>>, %arg5: memref<16x128xf32, #tpu.memory_space<vmem>>) attributes {dimension_semantics = [#tpu.dimension_semantics<parallel>, #tpu.dimension_semantics<parallel>, #tpu.dimension_semantics<arbitrary>], iteration_bounds = array<i64: 1, 1, 1>, scalar_prefetch = 0 : i64, scratch_operands = 0 : i64, tpu.core_type = #tpu.core_type<tc>, window_params = [{transform_indices = @transform_0, window_bounds = array<i64: 16, 128>}, {transform_indices = @transform_1, window_bounds = array<i64: 128, 128>}, {transform_indices = @transform_2, window_bounds = array<i64: 16, 128>}]} {
    %c0_i32 = arith.constant 0 : i32
    %0 = arith.cmpi eq, %arg2, %c0_i32 : i32
    %1 = arith.extui %0 : i1 to i32
    %c0_i32_0 = arith.constant 0 : i32
    %2 = arith.cmpi ne, %1, %c0_i32_0 : i32
    scf.if %2 {
      %cst_8 = arith.constant 0.000000e+00 : f32
      %9 = vector.broadcast %cst_8 : f32 to vector<16x128xf32>
      %c0_9 = arith.constant 0 : index
      %c0_10 = arith.constant 0 : index
      %10 = vector.load %arg5[%c0_9, %c0_10] : memref<16x128xf32, #tpu.memory_space<vmem>>, vector<16x128xf32>
      tpu.vector_store %arg5[%c0_9, %c0_10], %9 {strides = array<i32>} : memref<16x128xf32, #tpu.memory_space<vmem>>, vector<16x128xf32>,
    } else {
    }
    %c0 = arith.constant 0 : index
    %c0_1 = arith.constant 0 : index
    %3 = vector.load %arg5[%c0, %c0_1] : memref<16x128xf32, #tpu.memory_space<vmem>>, vector<16x128xf32>
    %c0_2 = arith.constant 0 : index
    %c0_3 = arith.constant 0 : index
    %4 = vector.load %arg3[%c0_2, %c0_3] : memref<16x128xbf16, #tpu.memory_space<vmem>>, vector<16x128xbf16>
    %c0_4 = arith.constant 0 : index
    %c0_5 = arith.constant 0 : index
    %5 = vector.load %arg4[%c0_4, %c0_5] : memref<128x128xbf16, #tpu.memory_space<vmem>>, vector<128x128xbf16>
    %cst = arith.constant dense<0.000000e+00> : vector<16x128xf32>
    %6 = tpu.matmul %4, %5, %cst {dimension_numbers = #tpu.dot_dimension_numbers<[1], [0], [0], [1], [0, 0, 1, 1], [], []>} : vector<16x128xbf16>, vector<128x128xbf16>, vector<16x128xf32> -> vector<16x128xf32>
    %7 = arith.addf %3, %6 : vector<16x128xf32>
    %c0_6 = arith.constant 0 : index
    %c0_7 = arith.constant 0 : index
    %8 = vector.load %arg5[%c0_6, %c0_7] : memref<16x128xf32, #tpu.memory_space<vmem>>, vector<16x128xf32>
    tpu.vector_store %arg5[%c0_6, %c0_7], %7 {strides = array<i32>} : memref<16x128xf32, #tpu.memory_space<vmem>>, vector<16x128xf32>,
    return
  }
  func.func @transform_0(%arg0: i32, %arg1: i32, %arg2: i32) -> (i32, i32) {
    %c0_i32 = arith.constant 0 : i32
    return %arg0, %arg2 : i32, i32
  }
  func.func @transform_1(%arg0: i32, %arg1: i32, %arg2: i32) -> (i32, i32) {
    %c0_i32 = arith.constant 0 : i32
    return %arg2, %arg1 : i32, i32
  }
  func.func @transform_2(%arg0: i32, %arg1: i32, %arg2: i32) -> (i32, i32) {
    %c0_i32 = arith.constant 0 : i32
    return %arg0, %arg1 : i32, i32
  }
}

</mosaic_0001>

<llo_original>
// kernel: dense_general_optimized.2
$region0: #{dense_general_optimized.2}
  #allocation0 [shape = 'u32[]', space=smem, size = 0x4, offset = 0x4, fixed_abs, tag = 'smem constant byte address 0x4 - core index']
  #allocation1 [shape = 'u32[144,128]{1,0:T(1,128)}', space=vmem, size = 0x12000, scoped, tag = 'internal scratch']
  #allocation2 [shape = 'u32[2048]{0}', space=vmem, size = 0x2000, scoped, tag = 'scoped memory for dense_general_optimized.2']
  #allocation3 [shape = 'u32[2048]{0}', space=vmem, size = 0x2000, scoped, tag = 'scoped memory for dense_general_optimized.2']
  #allocation4 [shape = 'u32[2048]{0}', space=vmem, size = 0x2000, scoped, tag = 'scoped memory for dense_general_optimized.2']
  #allocation5 [shape = 'u32[2048]{0}', space=vmem, size = 0x2000, scoped, tag = 'scoped memory for dense_general_optimized.2']
  #allocation6 [shape = 'u32[2048]{0}', space=vmem, size = 0x2000, scoped, tag = 'scoped memory for dense_general_optimized.2']
  #allocation7 [shape = 'u32[2048]{0}', space=vmem, size = 0x2000, scoped, tag = 'scoped memory for dense_general_optimized.2']
  #allocation8 [shape = 'u32[2048]{0}', space=vmem, size = 0x2000, scoped, tag = 'scoped memory for dense_general_optimized.2']
  #allocation9 [shape = 'u32[2048]{0}', space=vmem, size = 0x2000, scoped, tag = 'scoped memory for dense_general_optimized.2']
  #allocation10 [shape = 'u32[2048]{0}', space=vmem, size = 0x2000, scoped, tag = 'scoped memory for dense_general_optimized.2']
  #allocation11 [shape = 'u32[2048]{0}', space=vmem, size = 0x2000, scoped, tag = 'scoped memory for dense_general_optimized.2']
  %s0 = inlined_call_operand.vmem [shape: bf16[96,120], index: 0, kind: input, shape index: {}]
  %s1 = inlined_call_operand.<no memory space> [shape: bf16[], index: 1, kind: input, shape index: {}]
  %s2 = inlined_call_operand.vmem [shape: bf16[16,96], index: 2, kind: input, shape index: {}]
  %s3 = inlined_call_operand.vmem [shape: f32[16,128], index: 3, kind: output, shape index: {}]
  %s4 = sld [smem:[#allocation0]]
  $region22: #{dense_general_optimized.2} parent=0
    _
  %s6 = ssub.s32 1, %s4
  %s7 = scalar_select 0, %s6, %s4
  %v8 = vstv %s1
  %v9 = vunpack.i.l.bf16 %v8
  %v11 = vunpack.i.h.bf16 %v8
  %v13 = vstv %s1
  %v14 = vunpack.i.l.bf16 %v13
  %v16 = vunpack.i.h.bf16 %v13
  $region1: #{dense_general_optimized.2} parent=0
    #allocation12 [shape = 'u8[4096]{0}', space=vmem, size = 0x1000, dematerialized = true, scoped, tag = 'FusionAdapter Buffer %fusion.2 = bf16[16,128]{1,0:T(8,128)(2,1)} fusion(%param_2.1, %param_1.3), kind=kLoop, calls=%fused_computation.3.clone, metadata={op_name="jit(dense_general_optimized)/jit(_pad)/pad" stack_frame_id=11}']
    #allocation13 [shape = 'u8[32768]{0}', space=vmem, size = 0x8000, dematerialized = true, scoped, tag = 'FusionAdapter Buffer %fusion.1 = bf16[128,128]{1,0:T(8,128)(2,1)} fusion(%param_0.4, %param_1.3), kind=kLoop, calls=%fused_computation.1.clone, metadata={op_name="jit(dense_general_optimized)/jit(_pad)/pad" stack_frame_id=12}']
    // Predicated region
    $region2: #{dense_general_optimized.2} parent=1 // pred_check
      _
    $region3: #{dense_general_optimized.2} parent=1 // pred_check_branch
      %19 = sbr.rel (0) target = $region5
    $region4: #{dense_general_optimized.2} parent=1 // pred_region
      _
    $region5: #{dense_general_optimized.2} parent=1 // pred_fallthru
      _
    // Predicated region
    $region6: #{dense_general_optimized.2} parent=1 // pred_check
      _
    $region7: #{dense_general_optimized.2} parent=1 // pred_check_branch
      %21 = sbr.rel (0) target = $region9
    $region8: #{dense_general_optimized.2} parent=1 // pred_region
      _
    $region9: #{dense_general_optimized.2} parent=1 // pred_fallthru
      _
    %s23 = sor.u32 255, 127
    %s24 = sand.u32 %s23, 85
    %s25 = sshrl.u32 %s24, 1
    %s26 = sor.u32 %s24, %s25
    %s27 = sand.u32 51, %s26
    %s28 = sshrl.u32 %s27, 2
    %s29 = sor.u32 %s27, %s28
    %s30 = sand.u32 15, %s29
    %v31 = vld [vmem:[%s2] sm:%s30]
    %v32 = vunpack.c.l.bf16 %v31
    %v33 = vunpack.c.h.bf16 %v31
    %v34 = vlaneseq
    %v35 = vand.u32 %v34, 127
    %vm37 = vcmp.lt.s32.totalorder %v35, 96
    %v38 = vsel %vm37, %v32, %v9
    %v39 = vpack.c.bf16 0.0, %v38
    %41 = vst [vmem:[#allocation12] sm:$0xf] %v39
    %s42 = scalar_lea.vmem %s2, 4
    %s44 = sor.u32 255, 127
    %s45 = sand.u32 %s44, 85
    %s46 = sshrl.u32 %s45, 1
    %s47 = sor.u32 %s45, %s46
    %s48 = sand.u32 51, %s47
    %s49 = sshrl.u32 %s48, 2
    %s50 = sor.u32 %s48, %s49
    %s51 = sand.u32 15, %s50
    %v52 = vld [vmem:[%s42] sm:%s51]
    %v53 = vunpack.c.l.bf16 %v52
    %v54 = vunpack.c.h.bf16 %v52
    %v55 = vlaneseq
    %v56 = vand.u32 %v55, 127
    %vm58 = vcmp.lt.s32.totalorder %v56, 96
    %v59 = vsel %vm58, %v53, %v9
    %s60 = scalar_lea.vmem [#allocation12], 4
    %v61 = vpack.c.bf16 0.0, %v59
    %63 = vst [vmem:[%s60] sm:$0xf] %v61
    %s65 = sor.u32 255, 127
    %s66 = sand.u32 %s65, 85
    %s67 = sshrl.u32 %s66, 1
    %s68 = sor.u32 %s66, %s67
    %s69 = sand.u32 51, %s68
    %s70 = sshrl.u32 %s69, 2
    %s71 = sor.u32 %s69, %s70
    %s72 = sand.u32 15, %s71
    %v73 = vld [vmem:[%s0] sm:%s72]
    %v74 = vunpack.c.l.bf16 %v73
    %v75 = vunpack.c.h.bf16 %v73
    %v76 = vlaneseq
    %v77 = vand.u32 %v76, 127
    %vm79 = vcmp.lt.s32.totalorder %v77, 120
    %v80 = vsel %vm79, %v74, %v14
    %v81 = vpack.c.bf16 0.0, %v80
    %83 = vst [vmem:[#allocation13] sm:$0xf] %v81
    %s84 = scalar_lea.vmem %s0, 4
    %s86 = sor.u32 255, 127
    %s87 = sand.u32 %s86, 85
    %s88 = sshrl.u32 %s87, 1
    %s89 = sor.u32 %s87, %s88
    %s90 = sand.u32 51, %s89
    %s91 = sshrl.u32 %s90, 2
    %s92 = sor.u32 %s90, %s91
    %s93 = sand.u32 15, %s92
    %v94 = vld [vmem:[%s84] sm:%s93]
    %v95 = vunpack.c.l.bf16 %v94
    %v96 = vunpack.c.h.bf16 %v94
    %v97 = vlaneseq
    %v98 = vand.u32 %v97, 127
    %vm100 = vcmp.lt.s32.totalorder %v98, 120
    %v101 = vsel %vm100, %v95, %v14
    %s102 = scalar_lea.vmem [#allocation13], 4
    %v103 = vpack.c.bf16 0.0, %v101
    %105 = vst [vmem:[%s102] sm:$0xf] %v103
    %s106 = scalar_lea.vmem %s0, 8
    %s108 = sor.u32 255, 127
    %s109 = sand.u32 %s108, 85
    %s110 = sshrl.u32 %s109, 1
    %s111 = sor.u32 %s109, %s110
    %s112 = sand.u32 51, %s111
    %s113 = sshrl.u32 %s112, 2
    %s114 = sor.u32 %s112, %s113
    %s115 = sand.u32 15, %s114
    %v116 = vld [vmem:[%s106] sm:%s115]
    %v117 = vunpack.c.l.bf16 %v116
    %v118 = vunpack.c.h.bf16 %v116
    %v119 = vlaneseq
    %v120 = vand.u32 %v119, 127
    %vm122 = vcmp.lt.s32.totalorder %v120, 120
    %v123 = vsel %vm122, %v117, %v14
    %s124 = scalar_lea.vmem [#allocation13], 8
    %v125 = vpack.c.bf16 0.0, %v123
    %127 = vst [vmem:[%s124] sm:$0xf] %v125
    %s128 = scalar_lea.vmem %s0, 12
    %s130 = sor.u32 255, 127
    %s131 = sand.u32 %s130, 85
    %s132 = sshrl.u32 %s131, 1
    %s133 = sor.u32 %s131, %s132
    %s134 = sand.u32 51, %s133
    %s135 = sshrl.u32 %s134, 2
    %s136 = sor.u32 %s134, %s135
    %s137 = sand.u32 15, %s136
    %v138 = vld [vmem:[%s128] sm:%s137]
    %v139 = vunpack.c.l.bf16 %v138
    %v140 = vunpack.c.h.bf16 %v138
    %v141 = vlaneseq
    %v142 = vand.u32 %v141, 127
    %vm144 = vcmp.lt.s32.totalorder %v142, 120
    %v145 = vsel %vm144, %v139, %v14
    %s146 = scalar_lea.vmem [#allocation13], 12
    %v147 = vpack.c.bf16 0.0, %v145
    %149 = vst [vmem:[%s146] sm:$0xf] %v147
    %s150 = scalar_lea.vmem %s0, 16
    %s152 = sor.u32 255, 127
    %s153 = sand.u32 %s152, 85
    %s154 = sshrl.u32 %s153, 1
    %s155 = sor.u32 %s153, %s154
    %s156 = sand.u32 51, %s155
    %s157 = sshrl.u32 %s156, 2
    %s158 = sor.u32 %s156, %s157
    %s159 = sand.u32 15, %s158
    %v160 = vld [vmem:[%s150] sm:%s159]
    %v161 = vunpack.c.l.bf16 %v160
    %v162 = vunpack.c.h.bf16 %v160
    %v163 = vlaneseq
    %v164 = vand.u32 %v163, 127
    %vm166 = vcmp.lt.s32.totalorder %v164, 120
    %v167 = vsel %vm166, %v161, %v14
    %s168 = scalar_lea.vmem [#allocation13], 16
    %v169 = vpack.c.bf16 0.0, %v167
    %171 = vst [vmem:[%s168] sm:$0xf] %v169
    %s172 = scalar_lea.vmem %s0, 20
    %s174 = sor.u32 255, 127
    %s175 = sand.u32 %s174, 85
    %s176 = sshrl.u32 %s175, 1
    %s177 = sor.u32 %s175, %s176
    %s178 = sand.u32 51, %s177
    %s179 = sshrl.u32 %s178, 2
    %s180 = sor.u32 %s178, %s179
    %s181 = sand.u32 15, %s180
    %v182 = vld [vmem:[%s172] sm:%s181]
    %v183 = vunpack.c.l.bf16 %v182
    %v184 = vunpack.c.h.bf16 %v182
    %v185 = vlaneseq
    %v186 = vand.u32 %v185, 127
    %vm188 = vcmp.lt.s32.totalorder %v186, 120
    %v189 = vsel %vm188, %v183, %v14
    %s190 = scalar_lea.vmem [#allocation13], 20
    %v191 = vpack.c.bf16 0.0, %v189
    %193 = vst [vmem:[%s190] sm:$0xf] %v191
    %s194 = scalar_lea.vmem %s0, 24
    %s196 = sor.u32 255, 127
    %s197 = sand.u32 %s196, 85
    %s198 = sshrl.u32 %s197, 1
    %s199 = sor.u32 %s197, %s198
    %s200 = sand.u32 51, %s199
    %s201 = sshrl.u32 %s200, 2
    %s202 = sor.u32 %s200, %s201
    %s203 = sand.u32 15, %s202
    %v204 = vld [vmem:[%s194] sm:%s203]
    %v205 = vunpack.c.l.bf16 %v204
    %v206 = vunpack.c.h.bf16 %v204
    %v207 = vlaneseq
    %v208 = vand.u32 %v207, 127
    %vm210 = vcmp.lt.s32.totalorder %v208, 120
    %v211 = vsel %vm210, %v205, %v14
    %s212 = scalar_lea.vmem [#allocation13], 24
    %v213 = vpack.c.bf16 0.0, %v211
    %215 = vst [vmem:[%s212] sm:$0xf] %v213
    %s216 = scalar_lea.vmem %s0, 28
    %s218 = sor.u32 255, 127
    %s219 = sand.u32 %s218, 85
    %s220 = sshrl.u32 %s219, 1
    %s221 = sor.u32 %s219, %s220
    %s222 = sand.u32 51, %s221
    %s223 = sshrl.u32 %s222, 2
    %s224 = sor.u32 %s222, %s223
    %s225 = sand.u32 15, %s224
    %v226 = vld [vmem:[%s216] sm:%s225]
    %v227 = vunpack.c.l.bf16 %v226
    %v228 = vunpack.c.h.bf16 %v226
    %v229 = vlaneseq
    %v230 = vand.u32 %v229, 127
    %vm232 = vcmp.lt.s32.totalorder %v230, 120
    %v233 = vsel %vm232, %v227, %v14
    %s234 = scalar_lea.vmem [#allocation13], 28
    %v235 = vpack.c.bf16 0.0, %v233
    %237 = vst [vmem:[%s234] sm:$0xf] %v235
    %s238 = scalar_lea.vmem %s0, 32
    %s240 = sor.u32 255, 127
    %s241 = sand.u32 %s240, 85
    %s242 = sshrl.u32 %s241, 1
    %s243 = sor.u32 %s241, %s242
    %s244 = sand.u32 51, %s243
    %s245 = sshrl.u32 %s244, 2
    %s246 = sor.u32 %s244, %s245
    %s247 = sand.u32 15, %s246
    %v248 = vld [vmem:[%s238] sm:%s247]
    %v249 = vunpack.c.l.bf16 %v248
    %v250 = vunpack.c.h.bf16 %v248
    %v251 = vlaneseq
    %v252 = vand.u32 %v251, 127
    %vm254 = vcmp.lt.s32.totalorder %v252, 120
    %v255 = vsel %vm254, %v249, %v14
    %s256 = scalar_lea.vmem [#allocation13], 32
    %v257 = vpack.c.bf16 0.0, %v255
    %259 = vst [vmem:[%s256] sm:$0xf] %v257
    %s260 = scalar_lea.vmem %s0, 36
    %s262 = sor.u32 255, 127
    %s263 = sand.u32 %s262, 85
    %s264 = sshrl.u32 %s263, 1
    %s265 = sor.u32 %s263, %s264
    %s266 = sand.u32 51, %s265
    %s267 = sshrl.u32 %s266, 2
    %s268 = sor.u32 %s266, %s267
    %s269 = sand.u32 15, %s268
    %v270 = vld [vmem:[%s260] sm:%s269]
    %v271 = vunpack.c.l.bf16 %v270
    %v272 = vunpack.c.h.bf16 %v270
    %v273 = vlaneseq
    %v274 = vand.u32 %v273, 127
    %vm276 = vcmp.lt.s32.totalorder %v274, 120
    %v277 = vsel %vm276, %v271, %v14
    %s278 = scalar_lea.vmem [#allocation13], 36
    %v279 = vpack.c.bf16 0.0, %v277
    %281 = vst [vmem:[%s278] sm:$0xf] %v279
    %s282 = scalar_lea.vmem %s0, 40
    %s284 = sor.u32 255, 127
    %s285 = sand.u32 %s284, 85
    %s286 = sshrl.u32 %s285, 1
    %s287 = sor.u32 %s285, %s286
    %s288 = sand.u32 51, %s287
    %s289 = sshrl.u32 %s288, 2
    %s290 = sor.u32 %s288, %s289
    %s291 = sand.u32 15, %s290
    %v292 = vld [vmem:[%s282] sm:%s291]
    %v293 = vunpack.c.l.bf16 %v292
    %v294 = vunpack.c.h.bf16 %v292
    %v295 = vlaneseq
    %v296 = vand.u32 %v295, 127
    %vm298 = vcmp.lt.s32.totalorder %v296, 120
    %v299 = vsel %vm298, %v293, %v14
    %s300 = scalar_lea.vmem [#allocation13], 40
    %v301 = vpack.c.bf16 0.0, %v299
    %303 = vst [vmem:[%s300] sm:$0xf] %v301
    %s304 = scalar_lea.vmem %s0, 44
    %s306 = sor.u32 255, 127
    %s307 = sand.u32 %s306, 85
    %s308 = sshrl.u32 %s307, 1
    %s309 = sor.u32 %s307, %s308
    %s310 = sand.u32 51, %s309
    %s311 = sshrl.u32 %s310, 2
    %s312 = sor.u32 %s310, %s311
    %s313 = sand.u32 15, %s312
    %v314 = vld [vmem:[%s304] sm:%s313]
    %v315 = vunpack.c.l.bf16 %v314
    %v316 = vunpack.c.h.bf16 %v314
    %v317 = vlaneseq
    %v318 = vand.u32 %v317, 127
    %vm320 = vcmp.lt.s32.totalorder %v318, 120
    %v321 = vsel %vm320, %v315, %v14
    %s322 = scalar_lea.vmem [#allocation13], 44
    %v323 = vpack.c.bf16 0.0, %v321
    %325 = vst [vmem:[%s322] sm:$0xf] %v323
    %s326 = scalar_lea.vmem [#allocation13], 48
    %v327 = vpack.c.bf16 0.0, %v14
    %329 = vst [vmem:[%s326] sm:$0xf] %v327
    %s330 = scalar_lea.vmem [#allocation13], 52
    %v331 = vpack.c.bf16 0.0, %v14
    %333 = vst [vmem:[%s330] sm:$0xf] %v331
    %s334 = scalar_lea.vmem [#allocation13], 56
    %v335 = vpack.c.bf16 0.0, %v14
    %337 = vst [vmem:[%s334] sm:$0xf] %v335
    %s338 = scalar_lea.vmem [#allocation13], 60
    %v339 = vpack.c.bf16 0.0, %v14
    %341 = vst [vmem:[%s338] sm:$0xf] %v339
    %p343 = scmp.eq.s32.totalorder 0, 0
    // Predicated region
    $region10: #{dense_general_optimized.2} parent=1 // pred_check
      %p344 = pneg %p343
    $region11: #{dense_general_optimized.2} parent=1 // pred_check_branch
      %346 = sbr.rel (%p344) target = $region13
    $region12: #{dense_general_optimized.2} parent=1 // pred_region
      %347 = vst [vmem:[%s3] sm:$0xff] 0.0
      %348 = vst [vmem:[%s3 + $0x8] sm:$0xff] 0.0
    $region13: #{dense_general_optimized.2} parent=1 // pred_fallthru
      _
    %v349 = vld [vmem:[%s3] sm:$0xff]
    %v350 = vld [vmem:[%s3 + $0x8] sm:$0xff]
    %v351 = vld [vmem:[#allocation12] sm:$0xf]
    %v352 = vld [vmem:[#allocation12 + $0x4] sm:$0xf]
    %v353 = vld [vmem:[#allocation13] sm:$0xf]
    %v354 = vld [vmem:[#allocation13 + $0x4] sm:$0xf]
    %v355 = vld [vmem:[#allocation13 + $0x8] sm:$0xf]
    %v356 = vld [vmem:[#allocation13 + $0xc] sm:$0xf]
    %v357 = vld [vmem:[#allocation13 + $0x10] sm:$0xf]
    %v358 = vld [vmem:[#allocation13 + $0x14] sm:$0xf]
    %v359 = vld [vmem:[#allocation13 + $0x18] sm:$0xf]
    %v360 = vld [vmem:[#allocation13 + $0x1c] sm:$0xf]
    %v361 = vld [vmem:[#allocation13 + $0x20] sm:$0xf]
    %v362 = vld [vmem:[#allocation13 + $0x24] sm:$0xf]
    %v363 = vld [vmem:[#allocation13 + $0x28] sm:$0xf]
    %v364 = vld [vmem:[#allocation13 + $0x2c] sm:$0xf]
    %v365 = vld [vmem:[#allocation13 + $0x30] sm:$0xf]
    %v366 = vld [vmem:[#allocation13 + $0x34] sm:$0xf]
    %v367 = vld [vmem:[#allocation13 + $0x38] sm:$0xf]
    %v368 = vld [vmem:[#allocation13 + $0x3c] sm:$0xf]
    %v371 = vunpack.c.l.b16 %v351
    %v372 = vunpack.c.l.b16 %v352
    %v373 = vpack.c.b16 %v372, %v371
    %v391 = vunpack.c.l.b16 %v353
    %v392 = vunpack.c.l.b16 %v354
    %v393 = vunpack.c.l.b16 %v355
    %v394 = vunpack.c.l.b16 %v356
    %v395 = vunpack.c.l.b16 %v357
    %v396 = vunpack.c.l.b16 %v358
    %v397 = vunpack.c.l.b16 %v359
    %v398 = vunpack.c.l.b16 %v360
    %v399 = vunpack.c.l.b16 %v361
    %v400 = vunpack.c.l.b16 %v362
    %v401 = vunpack.c.l.b16 %v363
    %v402 = vunpack.c.l.b16 %v364
    %v403 = vunpack.c.l.b16 %v365
    %v404 = vunpack.c.l.b16 %v366
    %v405 = vunpack.c.l.b16 %v367
    %v406 = vunpack.c.l.b16 %v368
    %v407 = vpack.c.b16 %v392, %v391
    %v408 = vpack.c.b16 %v394, %v393
    %v409 = vpack.c.b16 %v396, %v395
    %v410 = vpack.c.b16 %v398, %v397
    %v411 = vpack.c.b16 %v400, %v399
    %v412 = vpack.c.b16 %v402, %v401
    %v413 = vpack.c.b16 %v404, %v403
    %v414 = vpack.c.b16 %v406, %v405
    %423 = vmatprep.subr.bf16.mxu0 0
    %424 = vmatpush1.bf16.msra.mxu0 %v407
    %425 = vmatprep.subr.bf16.mxu0 0
    %426 = vmatpush1.bf16.msra.mxu0 %v408
    %427 = vmatprep.subr.bf16.mxu0 0
    %428 = vmatpush1.bf16.msra.mxu0 %v409
    %429 = vmatprep.subr.bf16.mxu0 0
    %430 = vmatpush1.bf16.msra.mxu0 %v410
    %431 = vmatprep.subr.bf16.mxu0 0
    %432 = vmatpush1.bf16.msra.mxu0 %v411
    %433 = vmatprep.subr.bf16.mxu0 0
    %434 = vmatpush1.bf16.msra.mxu0 %v412
    %435 = vmatprep.subr.bf16.mxu0 0
    %436 = vmatpush1.bf16.msra.mxu0 %v413
    %437 = vmatprep.subr.bf16.mxu0 0
    %438 = vmatpush1.bf16.msra.mxu0 %v414
    %439 = vmatprep.subr.bf16.mxu0 0
    %440 = vmatpush1.bf16.msra.mxu0 0
    %441 = vmatprep.subr.bf16.mxu0 0
    %442 = vmatpush1.bf16.msra.mxu0 0
    %443 = vmatprep.subr.bf16.mxu0 0
    %444 = vmatpush1.bf16.msra.mxu0 0
    %445 = vmatprep.subr.bf16.mxu0 0
    %446 = vmatpush1.bf16.msra.mxu0 0
    %447 = vmatprep.subr.bf16.mxu0 0
    %448 = vmatpush1.bf16.msra.mxu0 0
    %449 = vmatprep.subr.bf16.mxu0 0
    %450 = vmatpush1.bf16.msra.mxu0 0
    %451 = vmatprep.subr.bf16.mxu0 0
    %452 = vmatpush1.bf16.msra.mxu0 0
    %453 = vmatprep.subr.bf16.mxu0 0
    %454 = vmatpush1.bf16.msra.mxu0 0
    %455 = vmatprep.mubr.bf16.mxu0 0
    %456 = vmatmul.mubr.bf16.gmra.mrb[0].mxu0 %v373
    %v457 = vpop.f32.mrb[0].mxu0
    %v458 = vadd.f32 0.0, %v457
    %v459 = vpop.f32.mrb[0].mxu0
    %v460 = vpop.f32.mrb[0].mxu0
    %v461 = vadd.f32 0.0, %v460
    %v462 = vpop.f32.mrb[0].mxu0
    %463 = vdwg.mxu0
    %v464 = vadd.f32 %v349, %v458
    %v465 = vadd.f32 %v350, %v461
    %466 = vst [vmem:[%s3] sm:$0xff] %v464
    %467 = vst [vmem:[%s3 + $0x8] sm:$0xff] %v465
    // Predicated region
    $region14: #{dense_general_optimized.2} parent=1 // pred_check
      _
    $region15: #{dense_general_optimized.2} parent=1 // pred_check_branch
      %469 = sbr.rel (0) target = $region17
    $region16: #{dense_general_optimized.2} parent=1 // pred_region
      _
    $region17: #{dense_general_optimized.2} parent=1 // pred_fallthru
      _
    // Predicated region
    $region18: #{dense_general_optimized.2} parent=1 // pred_check
      _
    $region19: #{dense_general_optimized.2} parent=1 // pred_check_branch
      %471 = sbr.rel (0) target = $region21
    $region20: #{dense_general_optimized.2} parent=1 // pred_region
      _
    $region21: #{dense_general_optimized.2} parent=1 // pred_fallthru
      _

</llo_original>
